<compile_context>
chip_gen: v6e
topology: v6e:2x2x1
jax: 0.10.0
libtpu: 0.0.40
codegen_flags: <defaults>
</compile_context>

<pallas_src>
import functools

import jax
import jax.numpy as jnp
import numpy as np
from jax.experimental import pallas as pl
from jax.experimental.pallas import tpu as pltpu


def _convblock_kernel(x_ref, w_ref, b_ref, o_ref, xbuf, *, H, W, has_relu):
    # x_ref: (1, Cin, H*W)     one batch element; channels on sublanes, flattened
    #                          spatial on the 128-lane axis (lane dense).
    # w_ref: (3, Cout, 3*Cin)  BN-scale-folded weights: w_ref[kw][co, kh*Cin+ci].
    # b_ref: (Cout, 1)         folded BN bias.
    # o_ref: (1, Cout, H*W)    lane-dense output (NCHW order, spatial flattened).
    # xbuf : (3*Cin, H*W + 2)  VMEM scratch: three kh-shifted, zero-padded copies
    #                          of the input stacked on the sublane axis.
    Cin = x_ref.shape[1]
    Cout = o_ref.shape[1]
    HW = H * W

    x = x_ref[0].astype(jnp.float32)                 # (Cin, HW)

    # In-kernel zero padding + kh stacking.  Row-block kh at lane j holds the
    # padded flat element j + kh*W - (W+1); out-of-range (H padding) stays zero.
    xbuf[...] = jnp.zeros_like(xbuf)
    xbuf[0:Cin, W + 1:HW + 2] = x[:, :HW - W + 1]            # kh = 0
    xbuf[Cin:2 * Cin, 1:HW + 1] = x                          # kh = 1
    xbuf[2 * Cin:3 * Cin, 0:HW - W + 1] = x[:, W - 1:]       # kh = 2

    # W-boundary masks (left/right column of each row), per output lane.
    lane = jax.lax.broadcasted_iota(jnp.int32, (1, HW), 1)
    wpos = lane % W
    mask_l = wpos > 0          # tap kw=0 (w offset -1) invalid at w == 0
    mask_r = wpos < W - 1      # tap kw=2 (w offset +1) invalid at w == W-1

    # kw = 0 / 1 / 2: contiguous lane shifts of the stacked buffer; contraction
    # over K = 3*Cin (kh and ci fused) -> 3 MXU pushes instead of 9.
    p0 = jnp.where(mask_l, xbuf[:, 0:HW], 0.0)
    p1 = xbuf[:, 1:HW + 1]
    p2 = jnp.where(mask_r, xbuf[:, 2:HW + 2], 0.0)

    acc = jnp.dot(w_ref[0], p0, preferred_element_type=jnp.float32)
    acc = acc + jnp.dot(w_ref[1], p1, preferred_element_type=jnp.float32)
    acc = acc + jnp.dot(w_ref[2], p2, preferred_element_type=jnp.float32)

    out = acc + b_ref[...]                            # (Cout, HW) + (Cout, 1)
    if has_relu:
        out = jnp.maximum(out, 0.0)
    o_ref[0] = out.astype(o_ref.dtype)


def conv_block(x_nchw, weight_oihw, gamma, beta, running_mean, running_var,
               *, eps=1e-5, has_relu=True):
    """ConvBlock forward.  x_nchw: (N, Cin, H, W). Returns (N, Cout, H, W)."""
    N, Cin, H, W = x_nchw.shape
    Cout = weight_oihw.shape[0]
    HW = H * W

    # ---- glue (tiny, constant-sized): fold BN into the conv weights ----
    scale = gamma / jnp.sqrt(running_var + eps)                          # (Cout,)
    bias = (beta - running_mean * scale).reshape(Cout, 1).astype(jnp.float32)
    w_folded = weight_oihw.astype(jnp.float32) * scale[:, None, None, None]
    # w_s[kw, co, kh*Cin + ci] = w_folded[co, ci, kh, kw]
    w_s = jnp.transpose(w_folded, (3, 0, 2, 1)).reshape(3, Cout, 3 * Cin)

    # Free metadata reshape: NCHW stays NCHW, no transpose / pad HBM passes.
    x_flat = x_nchw.reshape(N, Cin, HW)

    kernel = functools.partial(_convblock_kernel, H=H, W=W, has_relu=has_relu)

    out_flat = pl.pallas_call(
        kernel,
        out_shape=jax.ShapeDtypeStruct((N, Cout, HW), x_nchw.dtype),
        grid_spec=pltpu.PrefetchScalarGridSpec(
            num_scalar_prefetch=0,
            grid=(N,),
            in_specs=[
                pl.BlockSpec((1, Cin, HW), lambda n: (n, 0, 0)),
                pl.BlockSpec((3, Cout, 3 * Cin), lambda n: (0, 0, 0)),
                pl.BlockSpec((Cout, 1), lambda n: (0, 0)),
            ],
            out_specs=pl.BlockSpec((1, Cout, HW), lambda n: (n, 0, 0)),
            scratch_shapes=[pltpu.VMEM((3 * Cin, HW + 2), jnp.float32)],
        ),
        compiler_params=pltpu.CompilerParams(
            dimension_semantics=("parallel",),
        ),
    )(x_flat, w_s, bias)

    return out_flat.reshape(N, Cout, H, W)        # free reshape (already NCHW)


def _reference(x_nchw, weight_oihw, gamma, beta, mean, var, *, eps=1e-5, has_relu=True):
    out = jax.lax.conv_general_dilated(
        x_nchw, weight_oihw,
        window_strides=(1, 1), padding=((1, 1), (1, 1)),
        dimension_numbers=("NCHW", "OIHW", "NCHW"),
    )
    scale = (gamma / jnp.sqrt(var + eps)).reshape(1, -1, 1, 1)
    bias = (beta - mean * gamma / jnp.sqrt(var + eps)).reshape(1, -1, 1, 1)
    out = out * scale + bias
    if has_relu:
        out = jnp.maximum(out, 0.0)
    return out


if __name__ == "__main__":
    # Small shapes consistent with the module: batch=2, cin=4, cout=8, spatial=16.
    N, Cin, Cout, H, W = 2, 4, 8, 16, 16

    key = jax.random.PRNGKey(0)
    k_x, k_w, k_g, k_b, k_m, k_v = jax.random.split(key, 6)

    x = jax.random.normal(k_x, (N, Cin, H, W), dtype=jnp.float32)
    weight = jax.random.normal(k_w, (Cout, Cin, 3, 3), dtype=jnp.float32) * 0.1
    gamma = 1.0 + 0.1 * jax.random.normal(k_g, (Cout,), dtype=jnp.float32)
    beta = 0.1 * jax.random.normal(k_b, (Cout,), dtype=jnp.float32)
    running_mean = 0.1 * jax.random.normal(k_m, (Cout,), dtype=jnp.float32)
    running_var = jnp.abs(1.0 + 0.1 * jax.random.normal(k_v, (Cout,), dtype=jnp.float32))

    out = conv_block(x, weight, gamma, beta, running_mean, running_var, has_relu=True)
    out = jax.block_until_ready(out)

    ref = _reference(x, weight, gamma, beta, running_mean, running_var, has_relu=True)
    np.testing.assert_allclose(np.asarray(out), np.asarray(ref), rtol=1e-4, atol=1e-4)

    print("KERNEL_OK")
</pallas_src>

<mosaic_0001>
module attributes {stable_mosaic.version = 11 : i64} {
  func.func @_convblock_kernel(%arg0: i32, %arg1: memref<1x4x256xf32, #tpu.memory_space<vmem>>, %arg2: memref<3x8x12xf32, #tpu.memory_space<vmem>>, %arg3: memref<8x1xf32, #tpu.memory_space<vmem>>, %arg4: memref<1x8x256xf32, #tpu.memory_space<vmem>>, %arg5: memref<12x258xf32, #tpu.memory_space<vmem>>) attributes {dimension_semantics = [#tpu.dimension_semantics<parallel>], iteration_bounds = array<i64: 2>, scalar_prefetch = 0 : i64, scratch_operands = 1 : i64, tpu.core_type = #tpu.core_type<tc>, window_params = [{transform_indices = @transform_0, window_bounds = array<i64: 1, 4, 256>}, {pipeline_mode = #tpu.pipeline_mode<synchronous>, transform_indices = @transform_1, window_bounds = array<i64: 3, 8, 12>}, {pipeline_mode = #tpu.pipeline_mode<synchronous>, transform_indices = @transform_2, window_bounds = array<i64: 8, 1>}, {transform_indices = @transform_3, window_bounds = array<i64: 1, 8, 256>}]} {
    %c0 = arith.constant 0 : index
    %c0_0 = arith.constant 0 : index
    %c0_1 = arith.constant 0 : index
    %0 = vector.load %arg1[%c0, %c0_0, %c0_1] : memref<1x4x256xf32, #tpu.memory_space<vmem>>, vector<1x4x256xf32>
    %1 = vector.shape_cast %0 : vector<1x4x256xf32> to vector<4x256xf32>
    %cst = arith.constant 0.000000e+00 : f32
    %2 = vector.broadcast %cst : f32 to vector<12x258xf32>
    %c0_2 = arith.constant 0 : index
    %c0_3 = arith.constant 0 : index
    %3 = vector.load %arg5[%c0_2, %c0_3] : memref<12x258xf32, #tpu.memory_space<vmem>>, vector<12x258xf32>
    tpu.vector_store %arg5[%c0_2, %c0_3], %2 {strides = array<i32>} : memref<12x258xf32, #tpu.memory_space<vmem>>, vector<12x258xf32>,
    %4 = vector.extract_strided_slice %1 {offsets = [0, 0], sizes = [4, 241], strides = [1, 1]} : vector<4x256xf32> to vector<4x241xf32>
    %c0_4 = arith.constant 0 : index
    %c17 = arith.constant 17 : index
    %5 = vector.load %arg5[%c0_4, %c17] : memref<12x258xf32, #tpu.memory_space<vmem>>, vector<4x241xf32>
    tpu.vector_store %arg5[%c0_4, %c17], %4 {strides = array<i32>} : memref<12x258xf32, #tpu.memory_space<vmem>>, vector<4x241xf32>,
    %c4 = arith.constant 4 : index
    %c1 = arith.constant 1 : index
    %6 = vector.load %arg5[%c4, %c1] : memref<12x258xf32, #tpu.memory_space<vmem>>, vector<4x256xf32>
    tpu.vector_store %arg5[%c4, %c1], %1 {strides = array<i32>} : memref<12x258xf32, #tpu.memory_space<vmem>>, vector<4x256xf32>,
    %7 = vector.extract_strided_slice %1 {offsets = [0, 15], sizes = [4, 241], strides = [1, 1]} : vector<4x256xf32> to vector<4x241xf32>
    %c8 = arith.constant 8 : index
    %c0_5 = arith.constant 0 : index
    %8 = vector.load %arg5[%c8, %c0_5] : memref<12x258xf32, #tpu.memory_space<vmem>>, vector<4x241xf32>
    tpu.vector_store %arg5[%c8, %c0_5], %7 {strides = array<i32>} : memref<12x258xf32, #tpu.memory_space<vmem>>, vector<4x241xf32>,
    %9 = tpu.iota {dimensions = array<i32: 1>} : vector<1x256xi32>
    %c16_i32 = arith.constant 16 : i32
    %c0_i32 = arith.constant 0 : i32
    %10 = arith.cmpi eq, %c16_i32, %c0_i32 : i32
    %c1_i32 = arith.constant 1 : i32
    %11 = arith.select %10, %c1_i32, %c16_i32 : i32
    %12 = vector.broadcast %11 : i32 to vector<1x256xi32>
    %13 = arith.remsi %9, %12 : vector<1x256xi32>
    %c0_i32_6 = arith.constant 0 : i32
    %14 = vector.broadcast %c0_i32_6 : i32 to vector<1x256xi32>
    %15 = arith.cmpi ne, %13, %14 : vector<1x256xi32>
    %c0_i32_7 = arith.constant 0 : i32
    %16 = vector.broadcast %c0_i32_7 : i32 to vector<1x256xi32>
    %17 = arith.cmpi slt, %13, %16 : vector<1x256xi32>
    %c0_i32_8 = arith.constant 0 : i32
    %18 = arith.cmpi slt, %11, %c0_i32_8 : i32
    %19 = vector.broadcast %18 : i1 to vector<1x256xi1>
    %20 = vector.broadcast %19 : vector<1x256xi1> to vector<1x256xi1>
    %21 = arith.xori %17, %20 : vector<1x256xi1>
    %22 = arith.andi %21, %15 : vector<1x256xi1>
    %23 = vector.broadcast %11 : i32 to vector<1x256xi32>
    %24 = arith.addi %13, %23 : vector<1x256xi32>
    %25 = arith.select %22, %24, %13 : vector<1x256xi1>, vector<1x256xi32>
    %c0_i32_9 = arith.constant 0 : i32
    %26 = vector.broadcast %c0_i32_9 : i32 to vector<1x256xi32>
    %27 = arith.cmpi sgt, %25, %26 : vector<1x256xi32>
    %c15_i32 = arith.constant 15 : i32
    %28 = vector.broadcast %c15_i32 : i32 to vector<1x256xi32>
    %29 = arith.cmpi slt, %25, %28 : vector<1x256xi32>
    %c0_10 = arith.constant 0 : index
    %c0_11 = arith.constant 0 : index
    %30 = vector.load %arg5[%c0_10, %c0_11] : memref<12x258xf32, #tpu.memory_space<vmem>>, vector<12x256xf32>
    %cst_12 = arith.constant 0.000000e+00 : f32
    %31 = vector.shape_cast %27 : vector<1x256xi1> to vector<1x256xi1>
    %32 = vector.broadcast %31 : vector<1x256xi1> to vector<12x256xi1>
    %33 = vector.broadcast %cst_12 : f32 to vector<12x256xf32>
    %34 = arith.select %32, %30, %33 : vector<12x256xi1>, vector<12x256xf32>
    %c0_13 = arith.constant 0 : index
    %c1_14 = arith.constant 1 : index
    %35 = vector.load %arg5[%c0_13, %c1_14] : memref<12x258xf32, #tpu.memory_space<vmem>>, vector<12x256xf32>
    %c0_15 = arith.constant 0 : index
    %c2 = arith.constant 2 : index
    %36 = vector.load %arg5[%c0_15, %c2] : memref<12x258xf32, #tpu.memory_space<vmem>>, vector<12x256xf32>
    %cst_16 = arith.constant 0.000000e+00 : f32
    %37 = vector.shape_cast %29 : vector<1x256xi1> to vector<1x256xi1>
    %38 = vector.broadcast %37 : vector<1x256xi1> to vector<12x256xi1>
    %39 = vector.broadcast %cst_16 : f32 to vector<12x256xf32>
    %40 = arith.select %38, %36, %39 : vector<12x256xi1>, vector<12x256xf32>
    %c0_17 = arith.constant 0 : index
    %c0_18 = arith.constant 0 : index
    %c0_19 = arith.constant 0 : index
    %41 = vector.load %arg2[%c0_17, %c0_18, %c0_19] : memref<3x8x12xf32, #tpu.memory_space<vmem>>, vector<1x8x12xf32>
    %42 = vector.shape_cast %41 : vector<1x8x12xf32> to vector<8x12xf32>
    %cst_20 = arith.constant dense<0.000000e+00> : vector<8x256xf32>
    %43 = tpu.matmul %42, %34, %cst_20 {dimension_numbers = #tpu.dot_dimension_numbers<[1], [0], [0], [1], [0, 0, 1, 1], [], []>} : vector<8x12xf32>, vector<12x256xf32>, vector<8x256xf32> -> vector<8x256xf32>
    %c1_21 = arith.constant 1 : index
    %c0_22 = arith.constant 0 : index
    %c0_23 = arith.constant 0 : index
    %44 = vector.load %arg2[%c1_21, %c0_22, %c0_23] : memref<3x8x12xf32, #tpu.memory_space<vmem>>, vector<1x8x12xf32>
    %45 = vector.shape_cast %44 : vector<1x8x12xf32> to vector<8x12xf32>
    %cst_24 = arith.constant dense<0.000000e+00> : vector<8x256xf32>
    %46 = tpu.matmul %45, %35, %cst_24 {dimension_numbers = #tpu.dot_dimension_numbers<[1], [0], [0], [1], [0, 0, 1, 1], [], []>} : vector<8x12xf32>, vector<12x256xf32>, vector<8x256xf32> -> vector<8x256xf32>
    %47 = arith.addf %43, %46 : vector<8x256xf32>
    %c2_25 = arith.constant 2 : index
    %c0_26 = arith.constant 0 : index
    %c0_27 = arith.constant 0 : index
    %48 = vector.load %arg2[%c2_25, %c0_26, %c0_27] : memref<3x8x12xf32, #tpu.memory_space<vmem>>, vector<1x8x12xf32>
    %49 = vector.shape_cast %48 : vector<1x8x12xf32> to vector<8x12xf32>
    %cst_28 = arith.constant dense<0.000000e+00> : vector<8x256xf32>
    %50 = tpu.matmul %49, %40, %cst_28 {dimension_numbers = #tpu.dot_dimension_numbers<[1], [0], [0], [1], [0, 0, 1, 1], [], []>} : vector<8x12xf32>, vector<12x256xf32>, vector<8x256xf32> -> vector<8x256xf32>
    %51 = arith.addf %47, %50 : vector<8x256xf32>
    %c0_29 = arith.constant 0 : index
    %c0_30 = arith.constant 0 : index
    %52 = vector.load %arg3[%c0_29, %c0_30] : memref<8x1xf32, #tpu.memory_space<vmem>>, vector<8x1xf32>
    %53 = vector.broadcast %52 : vector<8x1xf32> to vector<8x256xf32>
    %54 = arith.addf %51, %53 : vector<8x256xf32>
    %cst_31 = arith.constant 0.000000e+00 : f32
    %55 = vector.broadcast %cst_31 : f32 to vector<8x256xf32>
    %56 = arith.maximumf %54, %55 : vector<8x256xf32>
    %c0_32 = arith.constant 0 : index
    %c0_33 = arith.constant 0 : index
    %c0_34 = arith.constant 0 : index
    %57 = vector.load %arg4[%c0_32, %c0_33, %c0_34] : memref<1x8x256xf32, #tpu.memory_space<vmem>>, vector<1x8x256xf32>
    %58 = vector.shape_cast %57 : vector<1x8x256xf32> to vector<8x256xf32>
    %59 = vector.shape_cast %56 : vector<8x256xf32> to vector<1x8x256xf32>
    tpu.vector_store %arg4[%c0_32, %c0_33, %c0_34], %59 {strides = array<i32>} : memref<1x8x256xf32, #tpu.memory_space<vmem>>, vector<1x8x256xf32>,
    return
  }
  func.func @transform_0(%arg0: i32) -> (i32, i32, i32) {
    %c0_i32 = arith.constant 0 : i32
    %c0_i32_0 = arith.constant 0 : i32
    %c0_i32_1 = arith.constant 0 : i32
    return %arg0, %c0_i32, %c0_i32_0 : i32, i32, i32
  }
  func.func @transform_1(%arg0: i32) -> (i32, i32, i32) {
    %c0_i32 = arith.constant 0 : i32
    %c0_i32_0 = arith.constant 0 : i32
    %c0_i32_1 = arith.constant 0 : i32
    %c0_i32_2 = arith.constant 0 : i32
    return %c0_i32, %c0_i32_0, %c0_i32_1 : i32, i32, i32
  }
  func.func @transform_2(%arg0: i32) -> (i32, i32) {
    %c0_i32 = arith.constant 0 : i32
    %c0_i32_0 = arith.constant 0 : i32
    %c0_i32_1 = arith.constant 0 : i32
    return %c0_i32, %c0_i32_0 : i32, i32
  }
  func.func @transform_3(%arg0: i32) -> (i32, i32, i32) {
    %c0_i32 = arith.constant 0 : i32
    %c0_i32_0 = arith.constant 0 : i32
    %c0_i32_1 = arith.constant 0 : i32
    return %arg0, %c0_i32, %c0_i32_0 : i32, i32, i32
  }
}

</mosaic_0001>

<llo_original>
// kernel: tpu_custom_call.1
$region0: #{tpu_custom_call.1}
  #allocation0 [shape = 'u32[]', space=smem, size = 0x4, offset = 0x4, fixed_abs, tag = 'smem constant byte address 0x4 - core index']
  #allocation1 [shape = 'u32[144,128]{1,0:T(1,128)}', space=vmem, size = 0x12000, scoped, tag = 'internal scratch']
  #allocation2 [shape = 'f32[12,258]{1,0:T(8,128)}', space=vmem, size = 0x6000, scoped, tag = 'scratch operand']
  %s0 = inlined_call_operand.hbm [shape: f32[2,4,256], index: 0, kind: input, shape index: {}]
  %s1 = inlined_call_operand.hbm [shape: f32[3,8,12], index: 1, kind: input, shape index: {}]
  %s2 = inlined_call_operand.vmem [shape: f32[8,1], index: 2, kind: input, shape index: {}]
  %s3 = inlined_call_operand.hbm [shape: f32[2,8,256], index: 3, kind: output, shape index: {}]
  %s4 = sld [smem:[#allocation0]]
  $region53: #{tpu_custom_call.1} parent=0
    _
  %s6 = ssub.s32 1, %s4
  %s7 = scalar_select 0, %s6, %s4
  $region1: #{tpu_custom_call.1} parent=0
    #allocation3 [shape = 'u8[8192]{0}', space=vmem, size = 0x2000, scoped, tag = 'input window, operand 0']
    #allocation4 [shape = 's32[2]{0}', space=sflag, size = 0x8, scoped, tag = 'scoped memory for tpu_custom_call.1']
    #allocation5 [shape = 's32[2]{0}', space=sflag, size = 0x8, scoped, tag = 'scoped memory for tpu_custom_call.1']
    #allocation6 [shape = 'u8[12288]{0}', space=vmem, size = 0x3000, scoped, tag = 'input window, operand 1, single buffered']
    #allocation7 [shape = 's32[1]{0}', space=sflag, size = 0x4, scoped, tag = 'scoped memory for tpu_custom_call.1']
    #allocation8 [shape = 'u8[16384]{0}', space=vmem, size = 0x4000, scoped, tag = 'output window, operand 0']
    %8 = vsyncpa [#allocation4], 0
    %s9 = scalar_lea.sflag [#allocation4], 1
    %10 = vsyncpa %s9, 0
    %11 = vsyncpa [#allocation7], 0
    %12 = vsyncpa [#allocation5], 0
    %s13 = scalar_lea.sflag [#allocation5], 1
    %14 = vsyncpa %s13, 0
    loop: start=0, step=1, limit=4
    $region2: #{tpu_custom_call.1} parent=1 // loop_pre_header
      _
    $region3: #{tpu_custom_call.1} parent=1 // loop_header
      %s16 = sphi 0, %s20
      %p17 = scmp.ge.s32.totalorder %s16, 4
      %s26 = sphi 0, %s28
      %s29 = sphi 0, %s26
      %s30 = sphi 0, %s29
      %s46 = sphi 0, %s30
      %s50 = sphi 0, %s50
      %s52 = sphi 0, %s50
      %s53 = sphi 0, %s52
      %s67 = sphi 0, %s53
      %s71 = sphi 0, %s71
      %s73 = sphi 0, %s71
      %s74 = sphi 0, %s73
      %s88 = sphi 0, %s74
      %s94 = sphi 0, %s96
      %s97 = sphi 0, %s94
      %s98 = sphi 0, %s97
      %s114 = sphi 0, %s98
    $region4: #{tpu_custom_call.1} parent=1 // loop_header_branch
      %19 = sbr.rel (%p17) target = $region8
    $region5: #{tpu_custom_call.1} parent=1 // loop_body
      %s21 = ssub.s32 %s16, 1
      %s22 = ssub.s32 %s16, 2
      %s23 = sadd.s32 %s16, 1
      %s24 = ssub.s32 %s16, %s23
      %p25 = scmp.eq.s32.totalorder %s24, 0
      %s27 = sadd.s32 %s26, 1
      %s28 = scalar_select %p25, %s26, %s27
      %p31 = pneg %p25
      %p32 = scmp.eq.s32.totalorder %s16, 1
      %p33 = por %p31, %p32
      %p34 = scmp.ne.s32.totalorder %s26, %s29
      %p35 = scmp.eq.s32.totalorder %s16, 0
      %p36 = por %p34, %p35
      %p37 = scmp.ne.s32.totalorder %s26, %s29
      %p38 = scmp.eq.s32.totalorder %s21, 1
      %p39 = por %p37, %p38
      %p40 = scmp.ne.s32.totalorder %s29, %s30
      %p41 = scmp.eq.s32.totalorder %s21, 0
      %p42 = por %p40, %p41
      %p43 = scmp.ne.s32.totalorder %s29, %s30
      %p44 = scmp.eq.s32.totalorder %s22, 1
      %p45 = por %p43, %p44
      %p47 = scmp.ne.s32.totalorder %s30, %s46
      %p48 = scmp.eq.s32.totalorder %s22, 0
      %p49 = por %p47, %p48
      %s51 = sadd.s32 %s50, 1
      %p54 = scmp.eq.s32.totalorder %s16, 1
      %p55 = scmp.ne.s32.totalorder %s50, %s52
      %p56 = scmp.eq.s32.totalorder %s16, 0
      %p57 = por %p55, %p56
      %p58 = scmp.ne.s32.totalorder %s50, %s52
      %p59 = scmp.eq.s32.totalorder %s21, 1
      %p60 = por %p58, %p59
      %p61 = scmp.ne.s32.totalorder %s52, %s53
      %p62 = scmp.eq.s32.totalorder %s21, 0
      %p63 = por %p61, %p62
      %p64 = scmp.ne.s32.totalorder %s52, %s53
      %p65 = scmp.eq.s32.totalorder %s22, 1
      %p66 = por %p64, %p65
      %p68 = scmp.ne.s32.totalorder %s53, %s67
      %p69 = scmp.eq.s32.totalorder %s22, 0
      %p70 = por %p68, %p69
      %s72 = sadd.s32 %s71, 1
      %p75 = scmp.eq.s32.totalorder %s16, 1
      %p76 = scmp.ne.s32.totalorder %s71, %s73
      %p77 = scmp.eq.s32.totalorder %s16, 0
      %p78 = por %p76, %p77
      %p79 = scmp.ne.s32.totalorder %s71, %s73
      %p80 = scmp.eq.s32.totalorder %s21, 1
      %p81 = por %p79, %p80
      %p82 = scmp.ne.s32.totalorder %s73, %s74
      %p83 = scmp.eq.s32.totalorder %s21, 0
      %p84 = por %p82, %p83
      %p85 = scmp.ne.s32.totalorder %s73, %s74
      %p86 = scmp.eq.s32.totalorder %s22, 1
      %p87 = por %p85, %p86
      %p89 = scmp.ne.s32.totalorder %s74, %s88
      %p90 = scmp.eq.s32.totalorder %s22, 0
      %p91 = por %p89, %p90
      %s92 = ssub.s32 %s16, %s23
      %p93 = scmp.eq.s32.totalorder %s92, 0
      %s95 = sadd.s32 %s94, 1
      %s96 = scalar_select %p93, %s94, %s95
      %p99 = pneg %p93
      %p100 = scmp.eq.s32.totalorder %s16, 1
      %p101 = por %p99, %p100
      %p102 = scmp.ne.s32.totalorder %s94, %s97
      %p103 = scmp.eq.s32.totalorder %s16, 0
      %p104 = por %p102, %p103
      %p105 = scmp.ne.s32.totalorder %s94, %s97
      %p106 = scmp.eq.s32.totalorder %s21, 1
      %p107 = por %p105, %p106
      %p108 = scmp.ne.s32.totalorder %s97, %s98
      %p109 = scmp.eq.s32.totalorder %s21, 0
      %p110 = por %p108, %p109
      %p111 = scmp.ne.s32.totalorder %s97, %s98
      %p112 = scmp.eq.s32.totalorder %s22, 1
      %p113 = por %p111, %p112
      %p115 = scmp.ne.s32.totalorder %s98, %s114
      %p116 = scmp.eq.s32.totalorder %s22, 0
      %p117 = por %p115, %p116
      %p118 = scmp.le.s32.totalorder 1, %s16
      %p119 = scmp.lt.s32.totalorder %s16, 3
      %p120 = pnand %p118, %p119
      %p121 = pneg %p120
      // Predicated region
      $region9: #{tpu_custom_call.1} parent=5 // pred_check
        _
      $region10: #{tpu_custom_call.1} parent=5 // pred_check_branch
        %123 = sbr.rel (%p120) target = $region12
      $region11: #{tpu_custom_call.1} parent=5 // pred_region
        %s124 = ssub.s32 %s16, 1
        // Predicated region
        $region13: #{tpu_custom_call.1} parent=11 // pred_check
          %p125 = pneg %p63
        $region14: #{tpu_custom_call.1} parent=11 // pred_check_branch
          %127 = sbr.rel (%p125) target = $region16
        $region15: #{tpu_custom_call.1} parent=11 // pred_region
          %s129 = ssub.s32 384, 384
          %130 = vsyncadd [#allocation7], %s129
          %s131 = sshll.u32 [#allocation6], 4
          %s132 = int_to_ptr.vmem [resolvable:$true] %s131
          %137 = dma.hbm_to_vmem [thread:$0]  %s1, 384, %s132, [#allocation7], 128, 128, 8
        $region16: #{tpu_custom_call.1} parent=11 // pred_fallthru
          _
        // Predicated region
        $region17: #{tpu_custom_call.1} parent=11 // pred_check
          %p138 = pneg %p84
        $region18: #{tpu_custom_call.1} parent=11 // pred_check_branch
          %140 = sbr.rel (%p138) target = $region20
        $region19: #{tpu_custom_call.1} parent=11 // pred_region
          _
        $region20: #{tpu_custom_call.1} parent=11 // pred_fallthru
          _
      $region12: #{tpu_custom_call.1} parent=5 // pred_fallthru
        _
      %p141 = scmp.lt.s32.totalorder %s16, 2
      // Predicated region
      $region21: #{tpu_custom_call.1} parent=5 // pred_check
        %p142 = pneg %p141
      $region22: #{tpu_custom_call.1} parent=5 // pred_check_branch
        %144 = sbr.rel (%p142) target = $region24
      $region23: #{tpu_custom_call.1} parent=5 // pred_region
        // Predicated region
        $region25: #{tpu_custom_call.1} parent=23 // pred_check
          %p145 = pneg %p36
        $region26: #{tpu_custom_call.1} parent=23 // pred_check_branch
          %147 = sbr.rel (%p145) target = $region28
        $region27: #{tpu_custom_call.1} parent=23 // pred_region
          %s148 = sand.u32 %s26, 1
          %s149 = scalar_lea.sflag [#allocation4], %s148
          %s150 = sand.u32 %s26, 1
          %s151 = smul.addr %s150, 8
          %s152 = scalar_lea.vmem [#allocation3], %s151
          %s154 = ssub.s32 128, 128
          %155 = vsyncadd %s149, %s154
          %s156 = smul.addr %s16, 2
          %s157 = smul.addr %s156, 64
          %s158 = scalar_lea.hbm %s0, %s157
          %s160 = sshll.u32 %s152, 4
          %s161 = int_to_ptr.vmem [resolvable:$true] %s160
          %163 = dma.hbm_to_vmem [thread:$0]  %s158, 128, %s161, %s149
        $region28: #{tpu_custom_call.1} parent=23 // pred_fallthru
          _
      $region24: #{tpu_custom_call.1} parent=5 // pred_fallthru
        _
      %p164 = scmp.le.s32.totalorder 1, %s16
      %p165 = scmp.lt.s32.totalorder %s16, 3
      %p166 = pnand %p164, %p165
      %p167 = pneg %p166
      // Predicated region
      $region29: #{tpu_custom_call.1} parent=5 // pred_check
        _
      $region30: #{tpu_custom_call.1} parent=5 // pred_check_branch
        %169 = sbr.rel (%p166) target = $region32
      $region31: #{tpu_custom_call.1} parent=5 // pred_region
        %s170 = ssub.s32 %s16, 1
        %s171 = sand.u32 %s29, 1
        %s172 = scalar_lea.sflag [#allocation4], %s171
        %s173 = sand.u32 %s29, 1
        %s174 = smul.addr %s173, 8
        %s175 = scalar_lea.vmem [#allocation3], %s174
        // Predicated region
        $region33: #{tpu_custom_call.1} parent=31 // pred_check
          %p176 = pneg %p42
        $region34: #{tpu_custom_call.1} parent=31 // pred_check_branch
          %178 = sbr.rel (%p176) target = $region36
        $region35: #{tpu_custom_call.1} parent=31 // pred_region
          %179 = dma.done %s172, 128
        $region36: #{tpu_custom_call.1} parent=31 // pred_fallthru
          _
        // Predicated region
        $region37: #{tpu_custom_call.1} parent=31 // pred_check
          %p180 = pneg %p63
        $region38: #{tpu_custom_call.1} parent=31 // pred_check_branch
          %182 = sbr.rel (%p180) target = $region40
        $region39: #{tpu_custom_call.1} parent=31 // pred_region
          %183 = dma.done [#allocation7], 384
        $region40: #{tpu_custom_call.1} parent=31 // pred_fallthru
          _
        %s184 = sand.u32 %s29, 1
        %s185 = scalar_lea.sflag [#allocation4], %s184
        %s186 = sand.u32 %s29, 1
        %s187 = smul.addr %s186, 8
        %s188 = scalar_lea.vmem [#allocation3], %s187
        %p189 = pneg %p42
        %p190 = pneg %p39
        %p191 = pneg %p63
        %p192 = pneg %p60
        %p193 = pneg %p84
        %p194 = pneg %p81
        %p195 = pneg %p110
        %p196 = pneg %p107
        %s197 = sand.u32 %s97, 1
        %s198 = scalar_lea.sflag [#allocation5], %s197
        %s199 = sand.u32 %s97, 1
        %s200 = smul.addr %s199, 16
        %s201 = scalar_lea.vmem [#allocation8], %s200
        %v202 = vld [vmem:[%s175] sm:$0xff]
        %203 = vst [vmem:[#allocation2] sm:$0xff] 0.0
        %204 = vst [vmem:[#allocation2 + $0x8] sm:$0xff] 0.0
        %vm205 = vcmask 15360
        %206 = vst.msk [vmem:[#allocation2 + $0x10] sm:$0xff] %vm205, 0.0
        %207 = vst [vmem:[#allocation2 + $0x18] sm:$0xf] 0.0
        %208 = vst [vmem:[#allocation2 + $0x20] sm:$0xf] 0.0
        %vm209 = vcmask 11264
        %210 = vst.msk [vmem:[#allocation2 + $0x28] sm:$0xf] %vm209, 0.0
        %v212 = vcombine.high %v202, %v202
        %213 = vrot.lane.b32.xlu0 %v202, 17
        %v214 = vpop.permute.xlu0 %213
        %215 = vrot.lane.b32.xlu0 %v212, 17
        %v216 = vpop.permute.xlu0 %215
        %vm217 = vcmask 138240
        %v218 = vsel %vm217, %v214, %v216
        %vm222 = vcmask 1043592
        %223 = vst.msk [vmem:[#allocation2] sm:$0xf] %vm222, %v214
        %224 = vst [vmem:[#allocation2 + $0x8] sm:$0xf] %v218
        %225 = vst.msk [vmem:[#allocation2 + $0x10] sm:$0xf] %vm209, %v216
        %v226 = vcombine.low %v202, %v202
        %227 = vrot.lane.b32.xlu0 %v226, 1
        %v228 = vpop.permute.xlu0 %227
        %229 = vrot.lane.b32.xlu0 %v202, 1
        %v230 = vpop.permute.xlu0 %229
        %vm231 = vcmask 7168
        %v232 = vsel %vm231, %v228, %v230
        %vm236 = vcmask 1047564
        %237 = vst.msk [vmem:[#allocation2] sm:$0xf0] %vm236, %v228
        %238 = vst [vmem:[#allocation2 + $0x8] sm:$0xf0] %v232
        %vm239 = vcmask 7172
        %240 = vst.msk [vmem:[#allocation2 + $0x10] sm:$0xf0] %vm239, %v230
        %241 = vrot.lane.b32.xlu0 %v202, 113
        %v242 = vpop.permute.xlu0 %241
        %243 = vrot.lane.b32.xlu0 %v212, 113
        %v244 = vpop.permute.xlu0 %243
        %vm245 = vcmask 924672
        %v246 = vsel %vm245, %v242, %v244
        %249 = vst [vmem:[#allocation2 + $0x18] sm:$0xf] %v246
        %vm250 = vcmask 920576
        %251 = vst.msk [vmem:[#allocation2 + $0x20] sm:$0xf] %vm250, %v244
        %v252 = vlaneseq
        %v253 = vand.u32 %v252, 127
        %v254 = vadd.s32 %v253, 128
        %vm255 = vcmp.lt.s32.totalorder %v253, 0
        %v256 = vsub.s32 0, %v253
        %v257 = vsel %vm255, %v256, %v253
        %v258 = vshrl.u32 %v257, 4
        %v259 = vand.u32 %v257, 15
        %v260 = vsub.s32 0, %v259
        %v261 = vsel %vm255, %v260, %v259
        %vm262 = vcmp.lt.s32.totalorder %v254, 0
        %v263 = vsub.s32 0, %v254
        %v264 = vsel %vm262, %v263, %v254
        %v265 = vshrl.u32 %v264, 4
        %v266 = vand.u32 %v264, 15
        %v267 = vsub.s32 0, %v266
        %v268 = vsel %vm262, %v267, %v266
        %vm269 = vcmp.ne.s32.totalorder %v261, 0
        %vm270 = vcmp.ne.s32.totalorder %v268, 0
        %vm271 = vcmp.lt.s32.totalorder %v261, 0
        %vm272 = vcmp.lt.s32.totalorder %v268, 0
        %vm273 = vmand %vm271, %vm269
        %vm274 = vmand %vm272, %vm270
        %v275 = vadd.s32 %v261, 16
        %v276 = vadd.s32 %v268, 16
        %v277 = vsel %vm273, %v275, %v261
        %v278 = vsel %vm274, %v276, %v268
        %vm279 = vcmp.gt.s32.totalorder %v277, 0
        %vm280 = vcmp.gt.s32.totalorder %v278, 0
        %vm281 = vcmp.lt.s32.totalorder %v277, 15
        %vm282 = vcmp.lt.s32.totalorder %v278, 15
        %v283 = vld [vmem:[#allocation2] sm:$0xff]
        %v284 = vld [vmem:[#allocation2 + $0x8] sm:$0xff]
        %v285 = vld [vmem:[#allocation2 + $0x18] sm:$0xf]
        %v286 = vld [vmem:[#allocation2 + $0x20] sm:$0xf]
        %v287 = vsel %vm279, 1, 0
        %v288 = vsel %vm280, 1, 0
        %vm289 = vcmp.eq.s32.totalorder %v287, 1
        %vm290 = vcmp.eq.s32.totalorder %v288, 1
        %v291 = vsel %vm289, %v283, 0.0
        %v292 = vsel %vm290, %v284, 0.0
        %v293 = vsel %vm289, %v285, 0.0
        %v294 = vsel %vm290, %v286, 0.0
        %v295 = vld [vmem:[#allocation2 + $0x10] sm:$0xff]
        %v296 = vld [vmem:[#allocation2 + $0x28] sm:$0xf]
        %v297 = vsel %vm281, 1, 0
        %v298 = vsel %vm282, 1, 0
        %vm299 = vcmp.eq.s32.totalorder %v297, 1
        %vm300 = vcmp.eq.s32.totalorder %v298, 1
        %307 = vrot.lane.b32.xlu0 %v283, 126
        %v308 = vpop.permute.xlu0 %307
        %309 = vrot.lane.b32.xlu0 %v284, 126
        %v310 = vpop.permute.xlu0 %309
        %311 = vrot.lane.b32.xlu0 %v295, 126
        %v312 = vpop.permute.xlu0 %311
        %313 = vrot.lane.b32.xlu0 %v285, 126
        %v314 = vpop.permute.xlu0 %313
        %315 = vrot.lane.b32.xlu0 %v286, 126
        %v316 = vpop.permute.xlu0 %315
        %317 = vrot.lane.b32.xlu0 %v296, 126
        %v318 = vpop.permute.xlu0 %317
        %vm319 = vcmask 1031168
        %v320 = vsel %vm319, %v308, %v310
        %v321 = vsel %vm319, %v310, %v312
        %v322 = vsel %vm319, %v314, %v316
        %v323 = vsel %vm319, %v316, %v318
        %v328 = vsel %vm299, %v320, 0.0
        %v329 = vsel %vm300, %v321, 0.0
        %v330 = vsel %vm299, %v322, 0.0
        %v331 = vsel %vm300, %v323, 0.0
        %v332 = vld [vmem:[#allocation6] sm:$0xff]
        %s333 = scalar_lea.vmem [#allocation6], 8
        %v334 = vld [vmem:[%s333] sm:$0xff]
        %335 = vrot.lane.b32.xlu0 %v283, 127
        %v336 = vpop.permute.xlu0 %335
        %337 = vrot.lane.b32.xlu0 %v284, 127
        %v338 = vpop.permute.xlu0 %337
        %339 = vrot.lane.b32.xlu0 %v295, 127
        %v340 = vpop.permute.xlu0 %339
        %341 = vrot.lane.b32.xlu0 %v285, 127
        %v342 = vpop.permute.xlu0 %341
        %343 = vrot.lane.b32.xlu0 %v286, 127
        %v344 = vpop.permute.xlu0 %343
        %345 = vrot.lane.b32.xlu0 %v296, 127
        %v346 = vpop.permute.xlu0 %345
        %vm347 = vcmask 1039360
        %v348 = vsel %vm347, %v336, %v338
        %v349 = vsel %vm347, %v338, %v340
        %v350 = vsel %vm347, %v342, %v344
        %v351 = vsel %vm347, %v344, %v346
        %vm354 = vcmask 97280
        %v356 = vsel %vm354, %v334, 0
        %vm358 = vcmask 1043456
        %v359 = vsel %vm358, %v350, 0
        %v361 = vsel %vm358, %v351, 0
        %363 = vmatprep.subr.mxu0 0.0
        %364 = vmatpush1.msra.mxu0 0.0
        %365 = vmatprep.subr.mxu0 0.0
        %366 = vmatpush1.msra.mxu0 0.0
        %367 = vmatprep.subr.mxu0 0.0
        %368 = vmatpush1.msra.mxu0 0.0
        %369 = vmatprep.subr.mxu0 0.0
        %370 = vmatpush1.msra.mxu0 0.0
        %371 = vmatprep.subr.mxu0 0.0
        %372 = vmatpush1.msra.mxu0 0.0
        %373 = vmatprep.subr.mxu0 0.0
        %374 = vmatpush1.msra.mxu0 0.0
        %375 = vmatprep.subr.mxu0 0.0
        %376 = vmatpush1.msra.mxu0 0.0
        %377 = vmatprep.subr.mxu0 0.0
        %378 = vmatpush1.msra.mxu0 0.0
        %379 = vmatprep.subr.mxu0 0.0
        %380 = vmatpush1.msra.mxu0 0.0
        %381 = vmatprep.subr.mxu0 0.0
        %382 = vmatpush1.msra.mxu0 0.0
        %383 = vmatprep.subr.mxu0 0.0
        %384 = vmatpush1.msra.mxu0 0.0
        %385 = vmatprep.subr.mxu0 0.0
        %386 = vmatpush1.msra.mxu0 0.0
        %387 = vmatprep.subr.mxu0 0.0
        %388 = vmatpush1.msra.mxu0 0.0
        %389 = vmatprep.subr.mxu0 0.0
        %390 = vmatpush1.msra.mxu0 0.0
        %391 = vmatprep.subr.mxu0 %v361
        %392 = vmatpush1.msra.mxu0 %v359
        %393 = vmatprep.subr.mxu0 %v349
        %394 = vmatpush1.msra.mxu0 %v348
        %395 = vmatprep.subr.mxu0 0.0
        %396 = vmatpush2.msra.mxu0 0.0
        %397 = vmatprep.subr.mxu0 0.0
        %398 = vmatpush2.msra.mxu0 0.0
        %399 = vmatprep.subr.mxu0 0.0
        %400 = vmatpush2.msra.mxu0 0.0
        %401 = vmatprep.subr.mxu0 0.0
        %402 = vmatpush2.msra.mxu0 0.0
        %403 = vmatprep.subr.mxu0 0.0
        %404 = vmatpush2.msra.mxu0 0.0
        %405 = vmatprep.subr.mxu0 0.0
        %406 = vmatpush2.msra.mxu0 0.0
        %407 = vmatprep.subr.mxu0 0.0
        %408 = vmatpush2.msra.mxu0 0.0
        %409 = vmatprep.subr.mxu0 0.0
        %410 = vmatpush2.msra.mxu0 0.0
        %411 = vmatprep.subr.mxu0 0.0
        %412 = vmatpush2.msra.mxu0 0.0
        %413 = vmatprep.subr.mxu0 0.0
        %414 = vmatpush2.msra.mxu0 0.0
        %415 = vmatprep.subr.mxu0 0.0
        %416 = vmatpush2.msra.mxu0 0.0
        %417 = vmatprep.subr.mxu0 0.0
        %418 = vmatpush2.msra.mxu0 0.0
        %419 = vmatprep.subr.mxu0 0.0
        %420 = vmatpush2.msra.mxu0 0.0
        %421 = vmatprep.subr.mxu0 0.0
        %422 = vmatpush2.msra.mxu0 0.0
        %423 = vmatprep.subr.mxu0 0.0
        %424 = vmatpush2.msra.mxu0 0.0
        %425 = vmatprep.subr.mxu0 0.0
        %426 = vmatpush2.msra.mxu0 0.0
        %427 = vmatprep.mubr.f32.mxu0 0.0
        %428 = vmatmul.mubr.f32.gmra.mxu0 %v356
        %v429 = vpop.f32.mrf.mxu0
        %v430 = vadd.f32 0.0, %v429
        %v431 = vpop.f32.mrf.mxu0
        %v432 = vadd.f32 0.0, %v431
        %433 = vdwg.mxu0
        %v435 = vsel %vm354, %v332, 0
        %v438 = vsel %vm358, %v293, 0
        %v441 = vsel %vm358, %v294, 0
        %443 = vmatprep.subr.mxu0 0.0
        %444 = vmatpush1.msra.mxu0 0.0
        %445 = vmatprep.subr.mxu0 0.0
        %446 = vmatpush1.msra.mxu0 0.0
        %447 = vmatprep.subr.mxu0 0.0
        %448 = vmatpush1.msra.mxu0 0.0
        %449 = vmatprep.subr.mxu0 0.0
        %450 = vmatpush1.msra.mxu0 0.0
        %451 = vmatprep.subr.mxu0 0.0
        %452 = vmatpush1.msra.mxu0 0.0
        %453 = vmatprep.subr.mxu0 0.0
        %454 = vmatpush1.msra.mxu0 0.0
        %455 = vmatprep.subr.mxu0 0.0
        %456 = vmatpush1.msra.mxu0 0.0
        %457 = vmatprep.subr.mxu0 0.0
        %458 = vmatpush1.msra.mxu0 0.0
        %459 = vmatprep.subr.mxu0 0.0
        %460 = vmatpush1.msra.mxu0 0.0
        %461 = vmatprep.subr.mxu0 0.0
        %462 = vmatpush1.msra.mxu0 0.0
        %463 = vmatprep.subr.mxu0 0.0
        %464 = vmatpush1.msra.mxu0 0.0
        %465 = vmatprep.subr.mxu0 0.0
        %466 = vmatpush1.msra.mxu0 0.0
        %467 = vmatprep.subr.mxu0 0.0
        %468 = vmatpush1.msra.mxu0 0.0
        %469 = vmatprep.subr.mxu0 0.0
        %470 = vmatpush1.msra.mxu0 0.0
        %471 = vmatprep.subr.mxu0 %v441
        %472 = vmatpush1.msra.mxu0 %v438
        %473 = vmatprep.subr.mxu0 %v292
        %474 = vmatpush1.msra.mxu0 %v291
        %475 = vmatprep.subr.mxu0 0.0
        %476 = vmatpush2.msra.mxu0 0.0
        %477 = vmatprep.subr.mxu0 0.0
        %478 = vmatpush2.msra.mxu0 0.0
        %479 = vmatprep.subr.mxu0 0.0
        %480 = vmatpush2.msra.mxu0 0.0
        %481 = vmatprep.subr.mxu0 0.0
        %482 = vmatpush2.msra.mxu0 0.0
        %483 = vmatprep.subr.mxu0 0.0
        %484 = vmatpush2.msra.mxu0 0.0
        %485 = vmatprep.subr.mxu0 0.0
        %486 = vmatpush2.msra.mxu0 0.0
        %487 = vmatprep.subr.mxu0 0.0
        %488 = vmatpush2.msra.mxu0 0.0
        %489 = vmatprep.subr.mxu0 0.0
        %490 = vmatpush2.msra.mxu0 0.0
        %491 = vmatprep.subr.mxu0 0.0
        %492 = vmatpush2.msra.mxu0 0.0
        %493 = vmatprep.subr.mxu0 0.0
        %494 = vmatpush2.msra.mxu0 0.0
        %495 = vmatprep.subr.mxu0 0.0
        %496 = vmatpush2.msra.mxu0 0.0
        %497 = vmatprep.subr.mxu0 0.0
        %498 = vmatpush2.msra.mxu0 0.0
        %499 = vmatprep.subr.mxu0 0.0
        %500 = vmatpush2.msra.mxu0 0.0
        %501 = vmatprep.subr.mxu0 0.0
        %502 = vmatpush2.msra.mxu0 0.0
        %503 = vmatprep.subr.mxu0 0.0
        %504 = vmatpush2.msra.mxu0 0.0
        %505 = vmatprep.subr.mxu0 0.0
        %506 = vmatpush2.msra.mxu0 0.0
        %507 = vmatprep.mubr.f32.mxu0 0.0
        %508 = vmatmul.mubr.f32.gmra.mxu0 %v435
        %v509 = vpop.f32.mrf.mxu0
        %v510 = vadd.f32 %v430, %v509
        %v511 = vpop.f32.mrf.mxu0
        %v512 = vadd.f32 %v432, %v511
        %513 = vdwg.mxu0
        %s514 = scalar_lea.vmem [#allocation6], 16
        %v515 = vld [vmem:[%s514] sm:$0xff]
        %v517 = vsel %vm354, %v515, 0
        %v520 = vsel %vm358, %v330, 0
        %v523 = vsel %vm358, %v331, 0
        %525 = vmatprep.subr.mxu0 0.0
        %526 = vmatpush1.msra.mxu0 0.0
        %527 = vmatprep.subr.mxu0 0.0
        %528 = vmatpush1.msra.mxu0 0.0
        %529 = vmatprep.subr.mxu0 0.0
        %530 = vmatpush1.msra.mxu0 0.0
        %531 = vmatprep.subr.mxu0 0.0
        %532 = vmatpush1.msra.mxu0 0.0
        %533 = vmatprep.subr.mxu0 0.0
        %534 = vmatpush1.msra.mxu0 0.0
        %535 = vmatprep.subr.mxu0 0.0
        %536 = vmatpush1.msra.mxu0 0.0
        %537 = vmatprep.subr.mxu0 0.0
        %538 = vmatpush1.msra.mxu0 0.0
        %539 = vmatprep.subr.mxu0 0.0
        %540 = vmatpush1.msra.mxu0 0.0
        %541 = vmatprep.subr.mxu0 0.0
        %542 = vmatpush1.msra.mxu0 0.0
        %543 = vmatprep.subr.mxu0 0.0
        %544 = vmatpush1.msra.mxu0 0.0
        %545 = vmatprep.subr.mxu0 0.0
        %546 = vmatpush1.msra.mxu0 0.0
        %547 = vmatprep.subr.mxu0 0.0
        %548 = vmatpush1.msra.mxu0 0.0
        %549 = vmatprep.subr.mxu0 0.0
        %550 = vmatpush1.msra.mxu0 0.0
        %551 = vmatprep.subr.mxu0 0.0
        %552 = vmatpush1.msra.mxu0 0.0
        %553 = vmatprep.subr.mxu0 %v523
        %554 = vmatpush1.msra.mxu0 %v520
        %555 = vmatprep.subr.mxu0 %v329
        %556 = vmatpush1.msra.mxu0 %v328
        %557 = vmatprep.subr.mxu0 0.0
        %558 = vmatpush2.msra.mxu0 0.0
        %559 = vmatprep.subr.mxu0 0.0
        %560 = vmatpush2.msra.mxu0 0.0
        %561 = vmatprep.subr.mxu0 0.0
        %562 = vmatpush2.msra.mxu0 0.0
        %563 = vmatprep.subr.mxu0 0.0
        %564 = vmatpush2.msra.mxu0 0.0
        %565 = vmatprep.subr.mxu0 0.0
        %566 = vmatpush2.msra.mxu0 0.0
        %567 = vmatprep.subr.mxu0 0.0
        %568 = vmatpush2.msra.mxu0 0.0
        %569 = vmatprep.subr.mxu0 0.0
        %570 = vmatpush2.msra.mxu0 0.0
        %571 = vmatprep.subr.mxu0 0.0
        %572 = vmatpush2.msra.mxu0 0.0
        %573 = vmatprep.subr.mxu0 0.0
        %574 = vmatpush2.msra.mxu0 0.0
        %575 = vmatprep.subr.mxu0 0.0
        %576 = vmatpush2.msra.mxu0 0.0
        %577 = vmatprep.subr.mxu0 0.0
        %578 = vmatpush2.msra.mxu0 0.0
        %579 = vmatprep.subr.mxu0 0.0
        %580 = vmatpush2.msra.mxu0 0.0
        %581 = vmatprep.subr.mxu0 0.0
        %582 = vmatpush2.msra.mxu0 0.0
        %583 = vmatprep.subr.mxu0 0.0
        %584 = vmatpush2.msra.mxu0 0.0
        %585 = vmatprep.subr.mxu0 0.0
        %586 = vmatpush2.msra.mxu0 0.0
        %587 = vmatprep.subr.mxu0 0.0
        %588 = vmatpush2.msra.mxu0 0.0
        %589 = vmatprep.mubr.f32.mxu0 0.0
        %590 = vmatmul.mubr.f32.gmra.mxu0 %v517
        %v591 = vpop.f32.mrf.mxu0
        %v592 = vadd.f32 0.0, %v591
        %v593 = vpop.f32.mrf.mxu0
        %v594 = vadd.f32 0.0, %v593
        %595 = vdwg.mxu0
        %v596 = vadd.f32 %v510, %v592
        %v597 = vadd.f32 %v512, %v594
        %v598 = vld [vmem:[%s2] sm:$0xff]
        %600 = vset.pattern.permute.xlu0 0
        %601 = vperm.xlu0 %600, %v598
        %v602 = vpop.permute.xlu0 %601
        %v604 = vadd.f32 %v596, %v602
        %v605 = vadd.f32 %v597, %v602
        %v606 = vmax.f32 %v604, 0.0
        %v607 = vmax.f32 %v605, 0.0
        %608 = vst [vmem:[%s201] sm:$0xff] %v606
        %609 = vst [vmem:[%s201 + $0x8] sm:$0xff] %v607
        %s610 = sand.u32 %s97, 1
        %s611 = scalar_lea.sflag [#allocation5], %s610
        %s612 = sand.u32 %s97, 1
        %s613 = smul.addr %s612, 16
        %s614 = scalar_lea.vmem [#allocation8], %s613
        // Predicated region
        $region41: #{tpu_custom_call.1} parent=31 // pred_check
          %p615 = pneg %p107
        $region42: #{tpu_custom_call.1} parent=31 // pred_check_branch
          %617 = sbr.rel (%p615) target = $region44
        $region43: #{tpu_custom_call.1} parent=31 // pred_region
          %s619 = ssub.s32 256, 256
          %620 = vsyncadd %s611, %s619
          %s621 = smul.addr %s21, 2
          %s622 = smul.addr %s621, 128
          %s623 = scalar_lea.hbm %s3, %s622
          %s625 = sshll.u32 %s614, 4
          %s626 = int_to_ptr.vmem [resolvable:$true] %s625
          %628 = dma.vmem_to_hbm [thread:$0]  %s626, 256, %s623, %s611
        $region44: #{tpu_custom_call.1} parent=31 // pred_fallthru
          _
      $region32: #{tpu_custom_call.1} parent=5 // pred_fallthru
        _
      %p629 = scmp.le.s32.totalorder 2, %s16
      // Predicated region
      $region45: #{tpu_custom_call.1} parent=5 // pred_check
        %p630 = pneg %p629
      $region46: #{tpu_custom_call.1} parent=5 // pred_check_branch
        %632 = sbr.rel (%p630) target = $region48
      $region47: #{tpu_custom_call.1} parent=5 // pred_region
        %s633 = ssub.s32 %s16, 2
        // Predicated region
        $region49: #{tpu_custom_call.1} parent=47 // pred_check
          %p634 = pneg %p113
        $region50: #{tpu_custom_call.1} parent=47 // pred_check_branch
          %636 = sbr.rel (%p634) target = $region52
        $region51: #{tpu_custom_call.1} parent=47 // pred_region
          %s637 = sand.u32 %s98, 1
          %s638 = scalar_lea.sflag [#allocation5], %s637
          %s639 = sand.u32 %s98, 1
          %s640 = smul.addr %s639, 16
          %s641 = scalar_lea.vmem [#allocation8], %s640
          %642 = dma.done %s638, 256
        $region52: #{tpu_custom_call.1} parent=47 // pred_fallthru
          _
      $region48: #{tpu_custom_call.1} parent=5 // pred_fallthru
        _
    $region6: #{tpu_custom_call.1} parent=1 // loop_footer
      %s20 = sadd.s32 1, %s16
    $region7: #{tpu_custom_call.1} parent=1 // loop_footer_branch
      %15 = sbr.rel target = $region3
    $region8: #{tpu_custom_call.1} parent=1 // loop_exit
      _
    %643 = vsyncpa [#allocation4], 1
    %s644 = scalar_lea.sflag [#allocation4], 1
    %645 = vsyncpa %s644, 1
    %646 = vsyncpa [#allocation7], 1
    %647 = vsyncpa [#allocation5], 1
    %s648 = scalar_lea.sflag [#allocation5], 1
    %649 = vsyncpa %s648, 1

</llo_original>
